<compile_context>
chip_gen: v5e
topology: v5e:2x2
jax: 0.10.0
libtpu: 0.0.40
codegen_flags: <defaults>
</compile_context>

<pallas_src>
import functools
import math

import jax
import jax.numpy as jnp
from jax import lax
from jax.experimental import pallas as pl
from jax.experimental.pallas import tpu as pltpu


def _vmem_capacity_bytes():
    """Physical VMEM per TensorCore; conservative fallback if unavailable."""
    try:
        cap = int(pltpu.get_tpu_info().vmem_capacity_bytes)
        if cap > 0:
            return cap
    except Exception:
        pass
    return 64 * 1024 * 1024  # v7x per-TC VMEM (safe lower bound everywhere)


def _pick_tile_h(N, H, W, C, budget_bytes, itemsize):
    """Largest row tile (dividing H, flat width 128-aligned) fitting the budget."""
    g0 = 128 // math.gcd(W, 128)  # min rows so tile_h*W % 128 == 0
    # per-row bytes: double-buffered x block + double-buffered out block + y scratch
    per_row = W * itemsize * (2 * C + 2 * 4 * C + C // 2)
    max_rows = max(1, budget_bytes // per_row)

    best = None
    t = (min(H, max_rows) // g0) * g0
    while t >= g0:
        if H % t == 0:
            best = t
            break
        t -= g0
    if best is None:
        best = H  # full-array block is always a legal BlockSpec

    # Megacore / v7x: prefer >= 2 grid steps so both TensorCores get work.
    if N * (H // best) < 2:
        t = best // 2
        while t >= g0:
            if H % t == 0 and t % g0 == 0:
                best = t
                break
            t -= 1
    return best


def _upsample_kernel(x_ref, w_ref, b_ref, f_ref, fm_hbm, out_ref, y_ref, sem, *,
                     tile_h: int, width: int, c_out: int, group: int):
    # x_ref  : (1, Cin, tile_h*W)     input rows, channel-major, flat spatial
    # w_ref  : (Cout, Cin)            1x1 conv weight
    # b_ref  : (Cout, 1)              bias
    # f_ref  : (G*W, G*4W)            0/1 upsample matrix (width dup + row dup)
    # fm_hbm : (N, Cout, 4HW)         skip feature map, raw HBM ref (pl.ANY)
    # out_ref: (1, C, tile_h*4W)      output block, C = 2*Cout
    # y_ref  : (Cout, tile_h*W) f32   conv-result staging scratch
    W = width
    G = group
    n = pl.program_id(0)
    t = pl.program_id(1)

    # ---- skip connection: DMA feature_map rows straight from HBM into the
    # upper channel half of the output block (no VMEM staging block, no
    # VMEM->VMEM copy pass); overlapped with the conv compute below.
    fm_blk = tile_h * 4 * W
    fm_copy = pltpu.make_async_copy(
        fm_hbm.at[n, :, pl.ds(pl.multiple_of(t * fm_blk, fm_blk), fm_blk)],
        out_ref.at[0, c_out:, :],
        sem,
    )
    fm_copy.start()

    # ---- 1x1 conv over the whole row tile in one MXU call (lane-dense RHS);
    # bias broadcast emitted exactly once per grid step.
    y_ref[...] = (
        jnp.dot(w_ref[...], x_ref[0], preferred_element_type=jnp.float32)
        + b_ref[...]
    )

    # ---- nearest 2x upsample, G source rows per matmul.  F lays out the two
    # duplicated output rows of every source row contiguously in the flat NCHW
    # layout, so each iteration is: aligned lane-slice load, one matmul, one
    # lane-dense aligned store of G*4W lanes.
    f_mat = f_ref[...]
    n_groups = tile_h // G

    def body(g, carry):
        src = pl.multiple_of(g * (G * W), G * W)
        dst = pl.multiple_of(g * (4 * G * W), 4 * G * W)
        yg = y_ref[:, pl.ds(src, G * W)]                               # (Cout, G*W)
        zg = jnp.dot(yg, f_mat, preferred_element_type=jnp.float32)    # (Cout, G*4W)
        out_ref[0, 0:c_out, pl.ds(dst, 4 * G * W)] = zg.astype(out_ref.dtype)
        return carry

    lax.fori_loop(0, n_groups, body, 0, unroll=(n_groups <= 8))

    fm_copy.wait()


def upsample_forward(x, feature_map, weight, bias, *, tile_h=None):
    """Pallas equivalent of UpSample.forward.

    x:           (N, C, H, W)        NCHW
    feature_map: (N, C//2, 2H, 2W)   NCHW
    weight:      (C//2, C, 1, 1)     Conv2d weight
    bias:        (C//2,)             Conv2d bias
    returns:     (N, C, 2H, 2W)
    """
    N, C, H, W = x.shape
    assert C % 2 == 0, "channel count must be even"
    Cout = C // 2
    # Cout multiple of 8 (f32 sublane) -> dense channel-sliced stores / DMA.
    assert C % 16 == 0, "UpSample Pallas kernel requires C % 16 == 0"
    assert feature_map.shape == (N, Cout, 2 * H, 2 * W)
    assert weight.shape == (Cout, C, 1, 1)
    assert bias.shape == (Cout,)

    itemsize = jnp.dtype(x.dtype).itemsize
    vmem_cap = _vmem_capacity_bytes()
    vmem_limit = min(vmem_cap - 8 * 1024 * 1024, 100 * 1024 * 1024)
    if tile_h is None:
        tile_h = _pick_tile_h(N, H, W, C, int(vmem_limit * 0.75), itemsize)
    assert H % tile_h == 0, "tile_h must divide H"
    assert tile_h == H or (tile_h * W) % 128 == 0, \
        "tile_h*W must be a multiple of 128 (or tile_h == H)"
    n_row_tiles = H // tile_h

    # Rows grouped per upsample matmul: smallest G with (G*W) % 128 == 0.
    g0 = 128 // math.gcd(W, 128)
    G = g0 if (tile_h % g0 == 0 and g0 * W <= 512) else 1

    # ---- layout glue: FREE row-major reshapes only ---------------------------
    x_flat = x.reshape(N, C, H * W)                      # (N, Cin, H*W)
    w_mat = weight[:, :, 0, 0]                           # (Cout, Cin)
    b_mat = bias.reshape(Cout, 1)                        # (Cout, 1)
    fm_flat = feature_map.reshape(N, Cout, 4 * H * W)    # rows packed (h, dh, 2w+dw)

    # 0/1 upsample matrix F: F[i*W + w, i*4W + dh*2W + 2w + dw] = 1.
    rows = jnp.arange(G * W)
    cols = jnp.arange(G * 4 * W)
    row_i, row_w = rows // W, rows % W
    col_i, col_w = cols // (4 * W), (cols % (2 * W)) // 2
    f_mat = ((row_i[:, None] == col_i[None, :])
             & (row_w[:, None] == col_w[None, :])).astype(jnp.float32)

    kernel = functools.partial(_upsample_kernel, tile_h=tile_h, width=W,
                               c_out=Cout, group=G)

    flops = 2 * N * H * W * C * Cout + 8 * N * H * W * W * G * Cout
    bytes_accessed = ((x_flat.size + fm_flat.size + N * C * 4 * H * W
                       + w_mat.size + b_mat.size) * itemsize
                      + f_mat.size * 4)

    out_flat = pl.pallas_call(
        kernel,
        out_shape=jax.ShapeDtypeStruct((N, C, 4 * H * W), x.dtype),
        grid=(N, n_row_tiles),
        in_specs=[
            pl.BlockSpec((1, C, tile_h * W), lambda n, t: (n, 0, t)),        # x
            pl.BlockSpec((Cout, C), lambda n, t: (0, 0)),                    # weight
            pl.BlockSpec((Cout, 1), lambda n, t: (0, 0)),                    # bias
            pl.BlockSpec((G * W, 4 * G * W), lambda n, t: (0, 0)),           # F
            pl.BlockSpec(memory_space=pl.ANY),                               # fmap (HBM)
        ],
        out_specs=pl.BlockSpec((1, C, tile_h * 4 * W), lambda n, t: (n, 0, t)),
        scratch_shapes=[
            pltpu.VMEM((Cout, tile_h * W), jnp.float32),   # conv-result staging
            pltpu.SemaphoreType.DMA(()),                   # skip-path DMA sem
        ],
        compiler_params=pltpu.CompilerParams(
            dimension_semantics=("parallel", "parallel"),
            vmem_limit_bytes=int(vmem_limit),
        ),
        cost_estimate=pl.CostEstimate(
            flops=int(flops), transcendentals=0,
            bytes_accessed=int(bytes_accessed)),
    )(x_flat, w_mat, b_mat, f_mat, fm_flat)

    # (N, C, H*4W) -> (N, C, 2H, 2W): pure row-major reshape (free).
    return out_flat.reshape(N, C, 2 * H, 2 * W)


def upsample_reference(x, feature_map, weight, bias):
    """Pure-JAX reference matching the PyTorch module exactly."""
    up = jnp.repeat(jnp.repeat(x, 2, axis=2), 2, axis=3)
    out = (jnp.einsum('nchw,oc->nohw', up, weight[:, :, 0, 0])
           + bias[None, :, None, None])
    return jnp.concatenate([out, feature_map], axis=1)


if __name__ == "__main__":
    key = jax.random.PRNGKey(0)
    k1, k2, k3, k4 = jax.random.split(key, 4)

    N, C, H, W = 2, 16, 16, 16        # small shapes; C multiple of 16 (Cout % 8 == 0)
    x = jax.random.normal(k1, (N, C, H, W), jnp.float32)
    feature_map = jax.random.normal(k2, (N, C // 2, 2 * H, 2 * W), jnp.float32)
    weight = jax.random.normal(k3, (C // 2, C, 1, 1), jnp.float32) * (1.0 / C) ** 0.5
    bias = jax.random.normal(k4, (C // 2,), jnp.float32) * 0.1

    out = jax.block_until_ready(upsample_forward(x, feature_map, weight, bias))
    ref = upsample_reference(x, feature_map, weight, bias)

    assert out.shape == (N, C, 2 * H, 2 * W), out.shape
    assert out.dtype == jnp.float32
    assert jnp.allclose(out, ref, atol=1e-5, rtol=1e-5), "mismatch vs reference"
    print("KERNEL_OK")
</pallas_src>

<mosaic_0001>
module attributes {stable_mosaic.version = 11 : i64} {
  func.func @_upsample_kernel(%arg0: i32, %arg1: i32, %arg2: memref<1x16x256xf32, #tpu.memory_space<vmem>>, %arg3: memref<8x16xf32, #tpu.memory_space<vmem>>, %arg4: memref<8x1xf32, #tpu.memory_space<vmem>>, %arg5: memref<128x512xf32, #tpu.memory_space<vmem>>, %arg6: memref<2x8x1024xf32, #tpu.memory_space<any>>, %arg7: memref<1x16x1024xf32, #tpu.memory_space<vmem>>, %arg8: memref<8x256xf32, #tpu.memory_space<vmem>>, %arg9: memref<!tpu.dma_semaphore, #tpu.memory_space<semaphore_mem>>) attributes {dimension_semantics = [#tpu.dimension_semantics<parallel>, #tpu.dimension_semantics<parallel>], iteration_bounds = array<i64: 2, 1>, scalar_prefetch = 0 : i64, scratch_operands = 2 : i64, tpu.core_type = #tpu.core_type<tc>, window_params = [{transform_indices = @transform_0, window_bounds = array<i64: 1, 16, 256>}, {pipeline_mode = #tpu.pipeline_mode<synchronous>, transform_indices = @transform_1, window_bounds = array<i64: 8, 16>}, {pipeline_mode = #tpu.pipeline_mode<synchronous>, transform_indices = @transform_2, window_bounds = array<i64: 8, 1>}, {pipeline_mode = #tpu.pipeline_mode<synchronous>, transform_indices = @transform_3, window_bounds = array<i64: 128, 512>}, {}, {transform_indices = @transform_5, window_bounds = array<i64: 1, 16, 1024>}]} {
    %c1024_i32 = arith.constant 1024 : i32
    %0 = arith.muli %arg1, %c1024_i32 : i32
    %1 = tpu.assume_multiple %0, 1024 : i32
    %c0_i32 = arith.constant 0 : i32
    %c0_i32_0 = arith.constant 0 : i32
    %2 = tpu.memref_slice %arg6[%arg0, %c0_i32_0, %1] : memref<2x8x1024xf32, #tpu.memory_space<any>> -> memref<1x8x1024xf32, #tpu.memory_space<any>>
    %3 = tpu.memref_squeeze %2 : memref<1x8x1024xf32, #tpu.memory_space<any>> -> memref<8x1024xf32, #tpu.memory_space<any>>
    %c8_i32 = arith.constant 8 : i32
    %c0_i32_1 = arith.constant 0 : i32
    %4 = tpu.memref_slice %arg7[%c0_i32, %c8_i32, %c0_i32_1] : memref<1x16x1024xf32, #tpu.memory_space<vmem>> -> memref<1x8x1024xf32, #tpu.memory_space<vmem>>
    %5 = tpu.memref_squeeze %4 : memref<1x8x1024xf32, #tpu.memory_space<vmem>> -> memref<8x1024xf32, #tpu.memory_space<vmem>>
    tpu.enqueue_dma source(%3 : memref<8x1024xf32, #tpu.memory_space<any>>) target(%5 : memref<8x1024xf32, #tpu.memory_space<vmem>>) target_semaphore(%arg9 : memref<!tpu.dma_semaphore, #tpu.memory_space<semaphore_mem>>)
    %c0 = arith.constant 0 : index
    %c0_2 = arith.constant 0 : index
    %6 = vector.load %arg3[%c0, %c0_2] : memref<8x16xf32, #tpu.memory_space<vmem>>, vector<8x16xf32>
    %c0_3 = arith.constant 0 : index
    %c0_4 = arith.constant 0 : index
    %c0_5 = arith.constant 0 : index
    %7 = vector.load %arg2[%c0_3, %c0_4, %c0_5] : memref<1x16x256xf32, #tpu.memory_space<vmem>>, vector<1x16x256xf32>
    %8 = vector.shape_cast %7 : vector<1x16x256xf32> to vector<16x256xf32>
    %cst = arith.constant dense<0.000000e+00> : vector<8x256xf32>
    %9 = tpu.matmul %6, %8, %cst {dimension_numbers = #tpu.dot_dimension_numbers<[1], [0], [0], [1], [0, 0, 1, 1], [], []>} : vector<8x16xf32>, vector<16x256xf32>, vector<8x256xf32> -> vector<8x256xf32>
    %c0_6 = arith.constant 0 : index
    %c0_7 = arith.constant 0 : index
    %10 = vector.load %arg4[%c0_6, %c0_7] : memref<8x1xf32, #tpu.memory_space<vmem>>, vector<8x1xf32>
    %11 = vector.broadcast %10 : vector<8x1xf32> to vector<8x256xf32>
    %12 = arith.addf %9, %11 : vector<8x256xf32>
    %c0_8 = arith.constant 0 : index
    %c0_9 = arith.constant 0 : index
    %13 = vector.load %arg8[%c0_8, %c0_9] : memref<8x256xf32, #tpu.memory_space<vmem>>, vector<8x256xf32>
    tpu.vector_store %arg8[%c0_8, %c0_9], %12 {strides = array<i32>} : memref<8x256xf32, #tpu.memory_space<vmem>>, vector<8x256xf32>,
    %c0_10 = arith.constant 0 : index
    %c0_11 = arith.constant 0 : index
    %14 = vector.load %arg5[%c0_10, %c0_11] : memref<128x512xf32, #tpu.memory_space<vmem>>, vector<128x512xf32>
    %c0_i32_12 = arith.constant 0 : i32
    %c128_i32 = arith.constant 128 : i32
    %15 = arith.muli %c0_i32_12, %c128_i32 : i32
    %16 = tpu.assume_multiple %15, 128 : i32
    %c512_i32 = arith.constant 512 : i32
    %17 = arith.muli %c0_i32_12, %c512_i32 : i32
    %18 = tpu.assume_multiple %17, 512 : i32
    %c0_13 = arith.constant 0 : index
    %19 = arith.index_cast %16 : i32 to index
    %20 = vector.load %arg8[%c0_13, %19] : memref<8x256xf32, #tpu.memory_space<vmem>>, vector<8x128xf32>
    %cst_14 = arith.constant dense<0.000000e+00> : vector<8x512xf32>
    %21 = tpu.matmul %20, %14, %cst_14 {dimension_numbers = #tpu.dot_dimension_numbers<[1], [0], [0], [1], [0, 0, 1, 1], [], []>} : vector<8x128xf32>, vector<128x512xf32>, vector<8x512xf32> -> vector<8x512xf32>
    %c0_15 = arith.constant 0 : index
    %c0_16 = arith.constant 0 : index
    %22 = arith.index_cast %18 : i32 to index
    %23 = vector.load %arg7[%c0_15, %c0_16, %22] : memref<1x16x1024xf32, #tpu.memory_space<vmem>>, vector<1x8x512xf32>
    %24 = vector.shape_cast %23 : vector<1x8x512xf32> to vector<8x512xf32>
    %25 = vector.shape_cast %21 : vector<8x512xf32> to vector<1x8x512xf32>
    tpu.vector_store %arg7[%c0_15, %c0_16, %22], %25 {strides = array<i32>} : memref<1x16x1024xf32, #tpu.memory_space<vmem>>, vector<1x8x512xf32>,
    %c1_i32 = arith.constant 1 : i32
    %c128_i32_17 = arith.constant 128 : i32
    %26 = arith.muli %c1_i32, %c128_i32_17 : i32
    %27 = tpu.assume_multiple %26, 128 : i32
    %c512_i32_18 = arith.constant 512 : i32
    %28 = arith.muli %c1_i32, %c512_i32_18 : i32
    %29 = tpu.assume_multiple %28, 512 : i32
    %c0_19 = arith.constant 0 : index
    %30 = arith.index_cast %27 : i32 to index
    %31 = vector.load %arg8[%c0_19, %30] : memref<8x256xf32, #tpu.memory_space<vmem>>, vector<8x128xf32>
    %cst_20 = arith.constant dense<0.000000e+00> : vector<8x512xf32>
    %32 = tpu.matmul %31, %14, %cst_20 {dimension_numbers = #tpu.dot_dimension_numbers<[1], [0], [0], [1], [0, 0, 1, 1], [], []>} : vector<8x128xf32>, vector<128x512xf32>, vector<8x512xf32> -> vector<8x512xf32>
    %c0_21 = arith.constant 0 : index
    %c0_22 = arith.constant 0 : index
    %33 = arith.index_cast %29 : i32 to index
    %34 = vector.load %arg7[%c0_21, %c0_22, %33] : memref<1x16x1024xf32, #tpu.memory_space<vmem>>, vector<1x8x512xf32>
    %35 = vector.shape_cast %34 : vector<1x8x512xf32> to vector<8x512xf32>
    %36 = vector.shape_cast %32 : vector<8x512xf32> to vector<1x8x512xf32>
    tpu.vector_store %arg7[%c0_21, %c0_22, %33], %36 {strides = array<i32>} : memref<1x16x1024xf32, #tpu.memory_space<vmem>>, vector<1x8x512xf32>,
    %c2_i32 = arith.constant 2 : i32
    %c0_i32_23 = arith.constant 0 : i32
    %c0_i32_24 = arith.constant 0 : i32
    %37 = tpu.memref_slice %arg6[%arg0, %c0_i32_24, %1] : memref<2x8x1024xf32, #tpu.memory_space<any>> -> memref<1x8x1024xf32, #tpu.memory_space<any>>
    %38 = tpu.memref_squeeze %37 : memref<1x8x1024xf32, #tpu.memory_space<any>> -> memref<8x1024xf32, #tpu.memory_space<any>>
    %c8_i32_25 = arith.constant 8 : i32
    %c0_i32_26 = arith.constant 0 : i32
    %39 = tpu.memref_slice %arg7[%c0_i32_23, %c8_i32_25, %c0_i32_26] : memref<1x16x1024xf32, #tpu.memory_space<vmem>> -> memref<1x8x1024xf32, #tpu.memory_space<vmem>>
    %40 = tpu.memref_squeeze %39 : memref<1x8x1024xf32, #tpu.memory_space<vmem>> -> memref<8x1024xf32, #tpu.memory_space<vmem>>
    tpu.wait_dma2 semaphore(%arg9 : memref<!tpu.dma_semaphore, #tpu.memory_space<semaphore_mem>>) src(%38 : memref<8x1024xf32, #tpu.memory_space<any>>) dst(%40 : memref<8x1024xf32, #tpu.memory_space<vmem>>)
    return
  }
  func.func @transform_0(%arg0: i32, %arg1: i32) -> (i32, i32, i32) {
    %c0_i32 = arith.constant 0 : i32
    %c0_i32_0 = arith.constant 0 : i32
    return %arg0, %c0_i32, %arg1 : i32, i32, i32
  }
  func.func @transform_1(%arg0: i32, %arg1: i32) -> (i32, i32) {
    %c0_i32 = arith.constant 0 : i32
    %c0_i32_0 = arith.constant 0 : i32
    %c0_i32_1 = arith.constant 0 : i32
    return %c0_i32, %c0_i32_0 : i32, i32
  }
  func.func @transform_2(%arg0: i32, %arg1: i32) -> (i32, i32) {
    %c0_i32 = arith.constant 0 : i32
    %c0_i32_0 = arith.constant 0 : i32
    %c0_i32_1 = arith.constant 0 : i32
    return %c0_i32, %c0_i32_0 : i32, i32
  }
  func.func @transform_3(%arg0: i32, %arg1: i32) -> (i32, i32) {
    %c0_i32 = arith.constant 0 : i32
    %c0_i32_0 = arith.constant 0 : i32
    %c0_i32_1 = arith.constant 0 : i32
    return %c0_i32, %c0_i32_0 : i32, i32
  }
  func.func @transform_5(%arg0: i32, %arg1: i32) -> (i32, i32, i32) {
    %c0_i32 = arith.constant 0 : i32
    %c0_i32_0 = arith.constant 0 : i32
    return %arg0, %c0_i32, %arg1 : i32, i32, i32
  }
}

</mosaic_0001>

<llo_original>
// kernel: tpu_custom_call.1
$region0: #{tpu_custom_call.1}
  #allocation0 [shape = 'u32[]', space=smem, size = 0x4, offset = 0x4, fixed_abs, tag = 'smem constant byte address 0x4 - core index']
  #allocation1 [shape = 'u32[72,128]{1,0:T(1,128)}', space=vmem, size = 0x9000, scoped, tag = 'internal scratch']
  #allocation2 [shape = 'f32[8,256]{1,0:T(8,128)}', space=vmem, size = 0x2000, scoped, tag = 'scratch operand']
  #allocation3 [shape = 's32[1]{0}', space=sflag, size = 0x4, scoped, tag = 'scratch operand']
  #allocation10 [shape = 's32[]', space=sflag, size = 0x4, offset = 0, fixed_abs, tag = 'sflag constant byte address 0x0 - dummy sync flag']
  #allocation11 [shape = 's32[]', space=sflag, size = 0x4, offset = 0, fixed_abs, tag = 'sflag constant byte address 0x0 - dummy sync flag']
  #allocation12 [shape = 'u32[]', space=smem, size = 0x4, offset = 0x44, fixed_abs, tag = 'smem constant byte address 0x44 - assertion arg 0']
  #allocation13 [shape = 'u32[]', space=smem, size = 0x4, offset = 0x48, fixed_abs, tag = 'smem constant byte address 0x48 - assertion arg 1']
  %s0 = inlined_call_operand.hbm [shape: f32[2,16,256], index: 0, kind: input, shape index: {}]
  %s1 = inlined_call_operand.vmem [shape: f32[8,16], index: 1, kind: input, shape index: {}]
  %s2 = inlined_call_operand.vmem [shape: f32[8,1], index: 2, kind: input, shape index: {}]
  %s3 = inlined_call_operand.hbm [shape: f32[128,512], index: 3, kind: input, shape index: {}]
  %s4 = inlined_call_operand.hbm [shape: f32[2,8,1024], index: 4, kind: input, shape index: {}]
  %s5 = inlined_call_operand.hbm [shape: f32[2,16,1024], index: 5, kind: output, shape index: {}]
  %s6 = sld [smem:[#allocation0]]
  $region61: #{tpu_custom_call.1} parent=0
    _
  %s8 = ssub.s32 1, %s6
  %s9 = scalar_select 0, %s8, %s6
  $region1: #{tpu_custom_call.1} parent=0
    #allocation4 [shape = 'u8[32768]{0}', space=vmem, size = 0x8000, scoped, tag = 'input window, operand 0']
    #allocation5 [shape = 's32[2]{0}', space=sflag, size = 0x8, scoped, tag = 'scoped memory for tpu_custom_call.1']
    #allocation6 [shape = 's32[2]{0}', space=sflag, size = 0x8, scoped, tag = 'scoped memory for tpu_custom_call.1']
    #allocation7 [shape = 'u8[262144]{0}', space=vmem, size = 0x40000, scoped, tag = 'input window, operand 3, single buffered']
    #allocation8 [shape = 's32[1]{0}', space=sflag, size = 0x4, scoped, tag = 'scoped memory for tpu_custom_call.1']
    #allocation9 [shape = 'u8[131072]{0}', space=vmem, size = 0x20000, scoped, tag = 'output window, operand 0']
    %10 = vsyncpa [#allocation5], 0
    %s11 = scalar_lea.sflag [#allocation5], 1
    %12 = vsyncpa %s11, 0
    %13 = vsyncpa [#allocation8], 0
    %14 = vsyncpa [#allocation6], 0
    %s15 = scalar_lea.sflag [#allocation6], 1
    %16 = vsyncpa %s15, 0
    loop: start=0, step=1, limit=4
    $region2: #{tpu_custom_call.1} parent=1 // loop_pre_header
      _
    $region3: #{tpu_custom_call.1} parent=1 // loop_header
      %s18 = sphi 0, %s22
      %p19 = scmp.ge.s32.totalorder %s18, 4
      %s25 = sphi 0, %s37
      %s26 = sphi 0, %s33
      %s27 = sphi 0, %s25
      %s28 = sphi 0, %s26
      %s29 = sphi 0, %s27
      %s30 = sphi 0, %s28
      %s42 = sphi 0, %s44
      %s45 = sphi 0, %s42
      %s46 = sphi 0, %s45
      %s62 = sphi 0, %s46
      %s66 = sphi 0, %s66
      %s68 = sphi 0, %s66
      %s69 = sphi 0, %s68
      %s83 = sphi 0, %s69
      %s87 = sphi 0, %s87
      %s89 = sphi 0, %s87
      %s90 = sphi 0, %s89
      %s104 = sphi 0, %s90
      %s108 = sphi 0, %s108
      %s110 = sphi 0, %s108
      %s111 = sphi 0, %s110
      %s125 = sphi 0, %s111
      %s133 = sphi 0, %s135
      %s136 = sphi 0, %s133
      %s137 = sphi 0, %s136
      %s153 = sphi 0, %s137
    $region4: #{tpu_custom_call.1} parent=1 // loop_header_branch
      %21 = sbr.rel (%p19) target = $region8
    $region5: #{tpu_custom_call.1} parent=1 // loop_body
      %s23 = ssub.s32 %s18, 1
      %s24 = ssub.s32 %s18, 2
      %s31 = sadd.s32 1, %s26
      %p32 = scmp.ge.s32.totalorder %s31, 1
      %s33 = scalar_select %p32, 0, %s31
      %s34 = sadd.s32 1, %s25
      %s35 = scalar_select %p32, %s34, %s25
      %p36 = scmp.ge.s32.totalorder %s35, 2
      %s37 = scalar_select %p36, 0, %s35
      %s38 = ssub.s32 %s25, %s37
      %s39 = ssub.s32 %s26, %s33
      %s40 = sor.u32 %s38, %s39
      %p41 = scmp.eq.s32.totalorder %s40, 0
      %s43 = sadd.s32 %s42, 1
      %s44 = scalar_select %p41, %s42, %s43
      %p47 = pneg %p41
      %p48 = scmp.eq.s32.totalorder %s18, 1
      %p49 = por %p47, %p48
      %p50 = scmp.ne.s32.totalorder %s42, %s45
      %p51 = scmp.eq.s32.totalorder %s18, 0
      %p52 = por %p50, %p51
      %p53 = scmp.ne.s32.totalorder %s42, %s45
      %p54 = scmp.eq.s32.totalorder %s23, 1
      %p55 = por %p53, %p54
      %p56 = scmp.ne.s32.totalorder %s45, %s46
      %p57 = scmp.eq.s32.totalorder %s23, 0
      %p58 = por %p56, %p57
      %p59 = scmp.ne.s32.totalorder %s45, %s46
      %p60 = scmp.eq.s32.totalorder %s24, 1
      %p61 = por %p59, %p60
      %p63 = scmp.ne.s32.totalorder %s46, %s62
      %p64 = scmp.eq.s32.totalorder %s24, 0
      %p65 = por %p63, %p64
      %s67 = sadd.s32 %s66, 1
      %p70 = scmp.eq.s32.totalorder %s18, 1
      %p71 = scmp.ne.s32.totalorder %s66, %s68
      %p72 = scmp.eq.s32.totalorder %s18, 0
      %p73 = por %p71, %p72
      %p74 = scmp.ne.s32.totalorder %s66, %s68
      %p75 = scmp.eq.s32.totalorder %s23, 1
      %p76 = por %p74, %p75
      %p77 = scmp.ne.s32.totalorder %s68, %s69
      %p78 = scmp.eq.s32.totalorder %s23, 0
      %p79 = por %p77, %p78
      %p80 = scmp.ne.s32.totalorder %s68, %s69
      %p81 = scmp.eq.s32.totalorder %s24, 1
      %p82 = por %p80, %p81
      %p84 = scmp.ne.s32.totalorder %s69, %s83
      %p85 = scmp.eq.s32.totalorder %s24, 0
      %p86 = por %p84, %p85
      %s88 = sadd.s32 %s87, 1
      %p91 = scmp.eq.s32.totalorder %s18, 1
      %p92 = scmp.ne.s32.totalorder %s87, %s89
      %p93 = scmp.eq.s32.totalorder %s18, 0
      %p94 = por %p92, %p93
      %p95 = scmp.ne.s32.totalorder %s87, %s89
      %p96 = scmp.eq.s32.totalorder %s23, 1
      %p97 = por %p95, %p96
      %p98 = scmp.ne.s32.totalorder %s89, %s90
      %p99 = scmp.eq.s32.totalorder %s23, 0
      %p100 = por %p98, %p99
      %p101 = scmp.ne.s32.totalorder %s89, %s90
      %p102 = scmp.eq.s32.totalorder %s24, 1
      %p103 = por %p101, %p102
      %p105 = scmp.ne.s32.totalorder %s90, %s104
      %p106 = scmp.eq.s32.totalorder %s24, 0
      %p107 = por %p105, %p106
      %s109 = sadd.s32 %s108, 1
      %p112 = scmp.eq.s32.totalorder %s18, 1
      %p113 = scmp.ne.s32.totalorder %s108, %s110
      %p114 = scmp.eq.s32.totalorder %s18, 0
      %p115 = por %p113, %p114
      %p116 = scmp.ne.s32.totalorder %s108, %s110
      %p117 = scmp.eq.s32.totalorder %s23, 1
      %p118 = por %p116, %p117
      %p119 = scmp.ne.s32.totalorder %s110, %s111
      %p120 = scmp.eq.s32.totalorder %s23, 0
      %p121 = por %p119, %p120
      %p122 = scmp.ne.s32.totalorder %s110, %s111
      %p123 = scmp.eq.s32.totalorder %s24, 1
      %p124 = por %p122, %p123
      %p126 = scmp.ne.s32.totalorder %s111, %s125
      %p127 = scmp.eq.s32.totalorder %s24, 0
      %p128 = por %p126, %p127
      %s129 = ssub.s32 %s25, %s37
      %s130 = ssub.s32 %s26, %s33
      %s131 = sor.u32 %s129, %s130
      %p132 = scmp.eq.s32.totalorder %s131, 0
      %s134 = sadd.s32 %s133, 1
      %s135 = scalar_select %p132, %s133, %s134
      %p138 = pneg %p132
      %p139 = scmp.eq.s32.totalorder %s18, 1
      %p140 = por %p138, %p139
      %p141 = scmp.ne.s32.totalorder %s133, %s136
      %p142 = scmp.eq.s32.totalorder %s18, 0
      %p143 = por %p141, %p142
      %p144 = scmp.ne.s32.totalorder %s133, %s136
      %p145 = scmp.eq.s32.totalorder %s23, 1
      %p146 = por %p144, %p145
      %p147 = scmp.ne.s32.totalorder %s136, %s137
      %p148 = scmp.eq.s32.totalorder %s23, 0
      %p149 = por %p147, %p148
      %p150 = scmp.ne.s32.totalorder %s136, %s137
      %p151 = scmp.eq.s32.totalorder %s24, 1
      %p152 = por %p150, %p151
      %p154 = scmp.ne.s32.totalorder %s137, %s153
      %p155 = scmp.eq.s32.totalorder %s24, 0
      %p156 = por %p154, %p155
      %p157 = scmp.le.s32.totalorder 1, %s18
      %p158 = scmp.lt.s32.totalorder %s18, 3
      %p159 = pnand %p157, %p158
      %p160 = pneg %p159
      // Predicated region
      $region9: #{tpu_custom_call.1} parent=5 // pred_check
        _
      $region10: #{tpu_custom_call.1} parent=5 // pred_check_branch
        %162 = sbr.rel (%p159) target = $region12
      $region11: #{tpu_custom_call.1} parent=5 // pred_region
        %s163 = ssub.s32 %s18, 1
        // Predicated region
        $region13: #{tpu_custom_call.1} parent=11 // pred_check
          %p164 = pneg %p79
        $region14: #{tpu_custom_call.1} parent=11 // pred_check_branch
          %166 = sbr.rel (%p164) target = $region16
        $region15: #{tpu_custom_call.1} parent=11 // pred_region
          _
        $region16: #{tpu_custom_call.1} parent=11 // pred_fallthru
          _
        // Predicated region
        $region17: #{tpu_custom_call.1} parent=11 // pred_check
          %p167 = pneg %p100
        $region18: #{tpu_custom_call.1} parent=11 // pred_check_branch
          %169 = sbr.rel (%p167) target = $region20
        $region19: #{tpu_custom_call.1} parent=11 // pred_region
          _
        $region20: #{tpu_custom_call.1} parent=11 // pred_fallthru
          _
        // Predicated region
        $region21: #{tpu_custom_call.1} parent=11 // pred_check
          %p170 = pneg %p121
        $region22: #{tpu_custom_call.1} parent=11 // pred_check_branch
          %172 = sbr.rel (%p170) target = $region24
        $region23: #{tpu_custom_call.1} parent=11 // pred_region
          %174 = vsyncadd [#allocation8], 0
          %s175 = sshll.u32 %s3, 4
          %s176 = int_to_ptr.hbm [resolvable:$true] %s175
          %s177 = sshll.u32 [#allocation7], 4
          %s178 = int_to_ptr.vmem [resolvable:$true] %s177
          %183 = dma.hbm_to_vmem [thread:$0]  %s176, 8192, %s178, [#allocation8], 512, 512, 32
        $region24: #{tpu_custom_call.1} parent=11 // pred_fallthru
          _
      $region12: #{tpu_custom_call.1} parent=5 // pred_fallthru
        _
      %p184 = scmp.lt.s32.totalorder %s18, 2
      // Predicated region
      $region25: #{tpu_custom_call.1} parent=5 // pred_check
        %p185 = pneg %p184
      $region26: #{tpu_custom_call.1} parent=5 // pred_check_branch
        %187 = sbr.rel (%p185) target = $region28
      $region27: #{tpu_custom_call.1} parent=5 // pred_region
        // Predicated region
        $region29: #{tpu_custom_call.1} parent=27 // pred_check
          %p188 = pneg %p52
        $region30: #{tpu_custom_call.1} parent=27 // pred_check_branch
          %190 = sbr.rel (%p188) target = $region32
        $region31: #{tpu_custom_call.1} parent=27 // pred_region
          %s191 = sand.u32 %s42, 1
          %s192 = scalar_lea.sflag [#allocation5], %s191
          %s193 = sand.u32 %s42, 1
          %s194 = smul.addr %s193, 32
          %s195 = scalar_lea.vmem [#allocation4], %s194
          %s196 = smul.u32 2, %s26
          %198 = vsyncadd %s192, 0
          %s199 = smul.addr %s25, 4
          %s200 = sadd.s32 %s196, %s199
          %s201 = smul.addr %s200, 8
          %s202 = scalar_lea.hbm %s0, %s201
          %s203 = sshll.u32 %s202, 4
          %s204 = int_to_ptr.hbm [resolvable:$true] %s203
          %s205 = sshll.u32 %s195, 4
          %s206 = int_to_ptr.vmem [resolvable:$true] %s205
          %211 = dma.hbm_to_vmem [thread:$0]  %s204, 512, %s206, %s192, 256, 256, 16
        $region32: #{tpu_custom_call.1} parent=27 // pred_fallthru
          _
      $region28: #{tpu_custom_call.1} parent=5 // pred_fallthru
        _
      %p212 = scmp.le.s32.totalorder 1, %s18
      %p213 = scmp.lt.s32.totalorder %s18, 3
      %p214 = pnand %p212, %p213
      %p215 = pneg %p214
      // Predicated region
      $region33: #{tpu_custom_call.1} parent=5 // pred_check
        _
      $region34: #{tpu_custom_call.1} parent=5 // pred_check_branch
        %217 = sbr.rel (%p214) target = $region36
      $region35: #{tpu_custom_call.1} parent=5 // pred_region
        %s218 = ssub.s32 %s18, 1
        %s219 = sand.u32 %s45, 1
        %s220 = scalar_lea.sflag [#allocation5], %s219
        %s221 = sand.u32 %s45, 1
        %s222 = smul.addr %s221, 32
        %s223 = scalar_lea.vmem [#allocation4], %s222
        // Predicated region
        $region37: #{tpu_custom_call.1} parent=35 // pred_check
          %p224 = pneg %p58
        $region38: #{tpu_custom_call.1} parent=35 // pred_check_branch
          %226 = sbr.rel (%p224) target = $region40
        $region39: #{tpu_custom_call.1} parent=35 // pred_region
          %228 = dma.done %s220, 512
        $region40: #{tpu_custom_call.1} parent=35 // pred_fallthru
          _
        // Predicated region
        $region41: #{tpu_custom_call.1} parent=35 // pred_check
          %p229 = pneg %p121
        $region42: #{tpu_custom_call.1} parent=35 // pred_check_branch
          %231 = sbr.rel (%p229) target = $region44
        $region43: #{tpu_custom_call.1} parent=35 // pred_region
          %233 = dma.done [#allocation8], 8192
        $region44: #{tpu_custom_call.1} parent=35 // pred_fallthru
          _
        %s234 = sand.u32 %s45, 1
        %s235 = scalar_lea.sflag [#allocation5], %s234
        %s236 = sand.u32 %s45, 1
        %s237 = smul.addr %s236, 32
        %s238 = scalar_lea.vmem [#allocation4], %s237
        %p239 = pneg %p58
        %p240 = pneg %p55
        %p241 = pneg %p79
        %p242 = pneg %p76
        %p243 = pneg %p100
        %p244 = pneg %p97
        %p245 = pneg %p121
        %p246 = pneg %p118
        %p247 = pneg %p149
        %p248 = pneg %p146
        %s249 = sand.u32 %s136, 1
        %s250 = scalar_lea.sflag [#allocation6], %s249
        %s251 = sand.u32 %s136, 1
        %s252 = smul.addr %s251, 128
        %s253 = scalar_lea.vmem [#allocation9], %s252
        %s254 = smul.u32 2, %s28
        %s255 = smul.u32 8, %s28
        %s256 = smul.u32 %s28, 1024
        %s257 = sshra.s32 %s256, 7
        %s258 = sand.u32 %s256, 127
        %s259 = smul.u32 %s27, 8
        %s260 = sadd.s32 %s257, %s259
        %s261 = smul.addr %s260, 8
        %s262 = scalar_lea.hbm %s4, %s261
        %s263 = scalar_lea.vmem %s253, 64 [#allocation9]
        // Predicated region
        $region45: #{tpu_custom_call.1} parent=35 // pred_check
          _
        $region46: #{tpu_custom_call.1} parent=35 // pred_check_branch
          %265 = sbr.rel target = $region48
        $region47: #{tpu_custom_call.1} parent=35 // pred_region
          %266 = sst [smem:[#allocation12]] [#allocation11]
          %267 = sst [smem:[#allocation13]] [#allocation10]
        $region48: #{tpu_custom_call.1} parent=35 // pred_fallthru
          _
        %269 = shalt.err (0)
        %s271 = sshll.u32 %s262, 4
        %s272 = int_to_ptr.hbm [resolvable:$true] %s271
        %s273 = sshll.u32 %s263, 4
        %s274 = int_to_ptr.vmem [resolvable:$true] %s273
        %276 = dma.hbm_to_vmem [thread:$0]  %s272, 1024, %s274, [#allocation3]
        %v277 = vld [vmem:[%s1] sm:$0xff]
        %v278 = vld [vmem:[%s223] sm:$0xff]
        %v279 = vld [vmem:[%s223 + $0x8] sm:$0xff]
        %v280 = vld [vmem:[%s223 + $0x10] sm:$0xff]
        %v281 = vld [vmem:[%s223 + $0x18] sm:$0xff]
        %v282 = vld [vmem:[%s2] sm:$0xff]
        %284 = vset.pattern.permute.xlu0 0
        %285 = vperm.xlu0 %284, %v282
        %v286 = vpop.permute.xlu0 %285
        %vm288 = vcmask 130048
        %v290 = vsel %vm288, %v277, 0
        %292 = vmatpush.msra.mxu0 0.0
        %293 = vmatpush.msra.mxu0 0.0
        %294 = vmatpush.msra.mxu0 0.0
        %295 = vmatpush.msra.mxu0 0.0
        %296 = vmatpush.msra.mxu0 0.0
        %297 = vmatpush.msra.mxu0 0.0
        %298 = vmatpush.msra.mxu0 0.0
        %299 = vmatpush.msra.mxu0 0.0
        %300 = vmatpush.msra.mxu0 0.0
        %301 = vmatpush.msra.mxu0 0.0
        %302 = vmatpush.msra.mxu0 0.0
        %303 = vmatpush.msra.mxu0 0.0
        %304 = vmatpush.msra.mxu0 0.0
        %305 = vmatpush.msra.mxu0 0.0
        %306 = vmatpush.msra.mxu0 %v280
        %307 = vmatpush.msra.mxu0 %v278
        %308 = vmatmul.f32.gmra.mxu0 %v290
        %v309 = vpop.f32.mrf.mxu0
        %v310 = vadd.f32 %v286, %v309
        %311 = vdwg.mxu0
        %312 = vmatpush.msra.mxu0 0.0
        %313 = vmatpush.msra.mxu0 0.0
        %314 = vmatpush.msra.mxu0 0.0
        %315 = vmatpush.msra.mxu0 0.0
        %316 = vmatpush.msra.mxu0 0.0
        %317 = vmatpush.msra.mxu0 0.0
        %318 = vmatpush.msra.mxu0 0.0
        %319 = vmatpush.msra.mxu0 0.0
        %320 = vmatpush.msra.mxu0 0.0
        %321 = vmatpush.msra.mxu0 0.0
        %322 = vmatpush.msra.mxu0 0.0
        %323 = vmatpush.msra.mxu0 0.0
        %324 = vmatpush.msra.mxu0 0.0
        %325 = vmatpush.msra.mxu0 0.0
        %326 = vmatpush.msra.mxu0 %v281
        %327 = vmatpush.msra.mxu0 %v279
        %328 = vmatmul.f32.gmra.mxu0 %v290
        %v329 = vpop.f32.mrf.mxu0
        %v330 = vadd.f32 %v286, %v329
        %331 = vdwg.mxu0
        %332 = vst [vmem:[#allocation2] sm:$0xff] %v310
        %333 = vst [vmem:[#allocation2 + $0x8] sm:$0xff] %v330
        %v334 = vld [vmem:[#allocation7] sm:$0xff]
        %v335 = vld [vmem:[#allocation7 + $0x8] sm:$0xff]
        %v336 = vld [vmem:[#allocation7 + $0x10] sm:$0xff]
        %v337 = vld [vmem:[#allocation7 + $0x18] sm:$0xff]
        %v338 = vld [vmem:[#allocation7 + $0x20] sm:$0xff]
        %v339 = vld [vmem:[#allocation7 + $0x28] sm:$0xff]
        %v340 = vld [vmem:[#allocation7 + $0x30] sm:$0xff]
        %v341 = vld [vmem:[#allocation7 + $0x38] sm:$0xff]
        %v342 = vld [vmem:[#allocation7 + $0x40] sm:$0xff]
        %v343 = vld [vmem:[#allocation7 + $0x48] sm:$0xff]
        %v344 = vld [vmem:[#allocation7 + $0x50] sm:$0xff]
        %v345 = vld [vmem:[#allocation7 + $0x58] sm:$0xff]
        %v346 = vld [vmem:[#allocation7 + $0x60] sm:$0xff]
        %v347 = vld [vmem:[#allocation7 + $0x68] sm:$0xff]
        %v348 = vld [vmem:[#allocation7 + $0x70] sm:$0xff]
        %v349 = vld [vmem:[#allocation7 + $0x78] sm:$0xff]
        %v350 = vld [vmem:[#allocation7 + $0x80] sm:$0xff]
        %v351 = vld [vmem:[#allocation7 + $0x88] sm:$0xff]
        %v352 = vld [vmem:[#allocation7 + $0x90] sm:$0xff]
        %v353 = vld [vmem:[#allocation7 + $0x98] sm:$0xff]
        %v354 = vld [vmem:[#allocation7 + $0xa0] sm:$0xff]
        %v355 = vld [vmem:[#allocation7 + $0xa8] sm:$0xff]
        %v356 = vld [vmem:[#allocation7 + $0xb0] sm:$0xff]
        %v357 = vld [vmem:[#allocation7 + $0xb8] sm:$0xff]
        %v358 = vld [vmem:[#allocation7 + $0xc0] sm:$0xff]
        %v359 = vld [vmem:[#allocation7 + $0xc8] sm:$0xff]
        %v360 = vld [vmem:[#allocation7 + $0xd0] sm:$0xff]
        %v361 = vld [vmem:[#allocation7 + $0xd8] sm:$0xff]
        %v362 = vld [vmem:[#allocation7 + $0xe0] sm:$0xff]
        %v363 = vld [vmem:[#allocation7 + $0xe8] sm:$0xff]
        %v364 = vld [vmem:[#allocation7 + $0xf0] sm:$0xff]
        %v365 = vld [vmem:[#allocation7 + $0xf8] sm:$0xff]
        %v366 = vld [vmem:[#allocation7 + $0x100] sm:$0xff]
        %v367 = vld [vmem:[#allocation7 + $0x108] sm:$0xff]
        %v368 = vld [vmem:[#allocation7 + $0x110] sm:$0xff]
        %v369 = vld [vmem:[#allocation7 + $0x118] sm:$0xff]
        %v370 = vld [vmem:[#allocation7 + $0x120] sm:$0xff]
        %v371 = vld [vmem:[#allocation7 + $0x128] sm:$0xff]
        %v372 = vld [vmem:[#allocation7 + $0x130] sm:$0xff]
        %v373 = vld [vmem:[#allocation7 + $0x138] sm:$0xff]
        %v374 = vld [vmem:[#allocation7 + $0x140] sm:$0xff]
        %v375 = vld [vmem:[#allocation7 + $0x148] sm:$0xff]
        %v376 = vld [vmem:[#allocation7 + $0x150] sm:$0xff]
        %v377 = vld [vmem:[#allocation7 + $0x158] sm:$0xff]
        %v378 = vld [vmem:[#allocation7 + $0x160] sm:$0xff]
        %v379 = vld [vmem:[#allocation7 + $0x168] sm:$0xff]
        %v380 = vld [vmem:[#allocation7 + $0x170] sm:$0xff]
        %v381 = vld [vmem:[#allocation7 + $0x178] sm:$0xff]
        %v382 = vld [vmem:[#allocation7 + $0x180] sm:$0xff]
        %v383 = vld [vmem:[#allocation7 + $0x188] sm:$0xff]
        %v384 = vld [vmem:[#allocation7 + $0x190] sm:$0xff]
        %v385 = vld [vmem:[#allocation7 + $0x198] sm:$0xff]
        %v386 = vld [vmem:[#allocation7 + $0x1a0] sm:$0xff]
        %v387 = vld [vmem:[#allocation7 + $0x1a8] sm:$0xff]
        %v388 = vld [vmem:[#allocation7 + $0x1b0] sm:$0xff]
        %v389 = vld [vmem:[#allocation7 + $0x1b8] sm:$0xff]
        %v390 = vld [vmem:[#allocation7 + $0x1c0] sm:$0xff]
        %v391 = vld [vmem:[#allocation7 + $0x1c8] sm:$0xff]
        %v392 = vld [vmem:[#allocation7 + $0x1d0] sm:$0xff]
        %v393 = vld [vmem:[#allocation7 + $0x1d8] sm:$0xff]
        %v394 = vld [vmem:[#allocation7 + $0x1e0] sm:$0xff]
        %v395 = vld [vmem:[#allocation7 + $0x1e8] sm:$0xff]
        %v396 = vld [vmem:[#allocation7 + $0x1f0] sm:$0xff]
        %v397 = vld [vmem:[#allocation7 + $0x1f8] sm:$0xff]
        %v398 = vld [vmem:[#allocation2] sm:$0xff]
        %399 = vmatpush.msra.mxu0 %v394
        %400 = vmatpush.msra.mxu0 %v390
        %401 = vmatpush.msra.mxu0 %v386
        %402 = vmatpush.msra.mxu0 %v382
        %403 = vmatpush.msra.mxu0 %v378
        %404 = vmatpush.msra.mxu0 %v374
        %405 = vmatpush.msra.mxu0 %v370
        %406 = vmatpush.msra.mxu0 %v366
        %407 = vmatpush.msra.mxu0 %v362
        %408 = vmatpush.msra.mxu0 %v358
        %409 = vmatpush.msra.mxu0 %v354
        %410 = vmatpush.msra.mxu0 %v350
        %411 = vmatpush.msra.mxu0 %v346
        %412 = vmatpush.msra.mxu0 %v342
        %413 = vmatpush.msra.mxu0 %v338
        %414 = vmatpush.msra.mxu0 %v334
        %415 = vmatmul.f32.gmra.mxu0 %v398
        %v416 = vpop.f32.mrf.mxu0
        %v417 = vadd.f32 0.0, %v416
        %418 = vdwg.mxu0
        %419 = vmatpush.msra.mxu0 %v395
        %420 = vmatpush.msra.mxu0 %v391
        %421 = vmatpush.msra.mxu0 %v387
        %422 = vmatpush.msra.mxu0 %v383
        %423 = vmatpush.msra.mxu0 %v379
        %424 = vmatpush.msra.mxu0 %v375
        %425 = vmatpush.msra.mxu0 %v371
        %426 = vmatpush.msra.mxu0 %v367
        %427 = vmatpush.msra.mxu0 %v363
        %428 = vmatpush.msra.mxu0 %v359
        %429 = vmatpush.msra.mxu0 %v355
        %430 = vmatpush.msra.mxu0 %v351
        %431 = vmatpush.msra.mxu0 %v347
        %432 = vmatpush.msra.mxu0 %v343
        %433 = vmatpush.msra.mxu0 %v339
        %434 = vmatpush.msra.mxu0 %v335
        %435 = vmatmul.f32.gmra.mxu0 %v398
        %v436 = vpop.f32.mrf.mxu0
        %v437 = vadd.f32 0.0, %v436
        %438 = vdwg.mxu0
        %439 = vmatpush.msra.mxu0 %v396
        %440 = vmatpush.msra.mxu0 %v392
        %441 = vmatpush.msra.mxu0 %v388
        %442 = vmatpush.msra.mxu0 %v384
        %443 = vmatpush.msra.mxu0 %v380
        %444 = vmatpush.msra.mxu0 %v376
        %445 = vmatpush.msra.mxu0 %v372
        %446 = vmatpush.msra.mxu0 %v368
        %447 = vmatpush.msra.mxu0 %v364
        %448 = vmatpush.msra.mxu0 %v360
        %449 = vmatpush.msra.mxu0 %v356
        %450 = vmatpush.msra.mxu0 %v352
        %451 = vmatpush.msra.mxu0 %v348
        %452 = vmatpush.msra.mxu0 %v344
        %453 = vmatpush.msra.mxu0 %v340
        %454 = vmatpush.msra.mxu0 %v336
        %455 = vmatmul.f32.gmra.mxu0 %v398
        %v456 = vpop.f32.mrf.mxu0
        %v457 = vadd.f32 0.0, %v456
        %458 = vdwg.mxu0
        %459 = vmatpush.msra.mxu0 %v397
        %460 = vmatpush.msra.mxu0 %v393
        %461 = vmatpush.msra.mxu0 %v389
        %462 = vmatpush.msra.mxu0 %v385
        %463 = vmatpush.msra.mxu0 %v381
        %464 = vmatpush.msra.mxu0 %v377
        %465 = vmatpush.msra.mxu0 %v373
        %466 = vmatpush.msra.mxu0 %v369
        %467 = vmatpush.msra.mxu0 %v365
        %468 = vmatpush.msra.mxu0 %v361
        %469 = vmatpush.msra.mxu0 %v357
        %470 = vmatpush.msra.mxu0 %v353
        %471 = vmatpush.msra.mxu0 %v349
        %472 = vmatpush.msra.mxu0 %v345
        %473 = vmatpush.msra.mxu0 %v341
        %474 = vmatpush.msra.mxu0 %v337
        %475 = vmatmul.f32.gmra.mxu0 %v398
        %v476 = vpop.f32.mrf.mxu0
        %v477 = vadd.f32 0.0, %v476
        %478 = vdwg.mxu0
        %479 = vst [vmem:[%s253] sm:$0xff] %v417
        %480 = vst [vmem:[%s253 + $0x8] sm:$0xff] %v437
        %481 = vst [vmem:[%s253 + $0x10] sm:$0xff] %v457
        %482 = vst [vmem:[%s253 + $0x18] sm:$0xff] %v477
        %s483 = scalar_lea.vmem [#allocation2], 8
        %v484 = vld [vmem:[%s483] sm:$0xff]
        %485 = vmatpush.msra.mxu0 %v394
        %486 = vmatpush.msra.mxu0 %v390
        %487 = vmatpush.msra.mxu0 %v386
        %488 = vmatpush.msra.mxu0 %v382
        %489 = vmatpush.msra.mxu0 %v378
        %490 = vmatpush.msra.mxu0 %v374
        %491 = vmatpush.msra.mxu0 %v370
        %492 = vmatpush.msra.mxu0 %v366
        %493 = vmatpush.msra.mxu0 %v362
        %494 = vmatpush.msra.mxu0 %v358
        %495 = vmatpush.msra.mxu0 %v354
        %496 = vmatpush.msra.mxu0 %v350
        %497 = vmatpush.msra.mxu0 %v346
        %498 = vmatpush.msra.mxu0 %v342
        %499 = vmatpush.msra.mxu0 %v338
        %500 = vmatpush.msra.mxu0 %v334
        %501 = vmatmul.f32.gmra.mxu0 %v484
        %v502 = vpop.f32.mrf.mxu0
        %v503 = vadd.f32 0.0, %v502
        %504 = vdwg.mxu0
        %505 = vmatpush.msra.mxu0 %v395
        %506 = vmatpush.msra.mxu0 %v391
        %507 = vmatpush.msra.mxu0 %v387
        %508 = vmatpush.msra.mxu0 %v383
        %509 = vmatpush.msra.mxu0 %v379
        %510 = vmatpush.msra.mxu0 %v375
        %511 = vmatpush.msra.mxu0 %v371
        %512 = vmatpush.msra.mxu0 %v367
        %513 = vmatpush.msra.mxu0 %v363
        %514 = vmatpush.msra.mxu0 %v359
        %515 = vmatpush.msra.mxu0 %v355
        %516 = vmatpush.msra.mxu0 %v351
        %517 = vmatpush.msra.mxu0 %v347
        %518 = vmatpush.msra.mxu0 %v343
        %519 = vmatpush.msra.mxu0 %v339
        %520 = vmatpush.msra.mxu0 %v335
        %521 = vmatmul.f32.gmra.mxu0 %v484
        %v522 = vpop.f32.mrf.mxu0
        %v523 = vadd.f32 0.0, %v522
        %524 = vdwg.mxu0
        %525 = vmatpush.msra.mxu0 %v396
        %526 = vmatpush.msra.mxu0 %v392
        %527 = vmatpush.msra.mxu0 %v388
        %528 = vmatpush.msra.mxu0 %v384
        %529 = vmatpush.msra.mxu0 %v380
        %530 = vmatpush.msra.mxu0 %v376
        %531 = vmatpush.msra.mxu0 %v372
        %532 = vmatpush.msra.mxu0 %v368
        %533 = vmatpush.msra.mxu0 %v364
        %534 = vmatpush.msra.mxu0 %v360
        %535 = vmatpush.msra.mxu0 %v356
        %536 = vmatpush.msra.mxu0 %v352
        %537 = vmatpush.msra.mxu0 %v348
        %538 = vmatpush.msra.mxu0 %v344
        %539 = vmatpush.msra.mxu0 %v340
        %540 = vmatpush.msra.mxu0 %v336
        %541 = vmatmul.f32.gmra.mxu0 %v484
        %v542 = vpop.f32.mrf.mxu0
        %v543 = vadd.f32 0.0, %v542
        %544 = vdwg.mxu0
        %545 = vmatpush.msra.mxu0 %v397
        %546 = vmatpush.msra.mxu0 %v393
        %547 = vmatpush.msra.mxu0 %v389
        %548 = vmatpush.msra.mxu0 %v385
        %549 = vmatpush.msra.mxu0 %v381
        %550 = vmatpush.msra.mxu0 %v377
        %551 = vmatpush.msra.mxu0 %v373
        %552 = vmatpush.msra.mxu0 %v369
        %553 = vmatpush.msra.mxu0 %v365
        %554 = vmatpush.msra.mxu0 %v361
        %555 = vmatpush.msra.mxu0 %v357
        %556 = vmatpush.msra.mxu0 %v353
        %557 = vmatpush.msra.mxu0 %v349
        %558 = vmatpush.msra.mxu0 %v345
        %559 = vmatpush.msra.mxu0 %v341
        %560 = vmatpush.msra.mxu0 %v337
        %561 = vmatmul.f32.gmra.mxu0 %v484
        %v562 = vpop.f32.mrf.mxu0
        %v563 = vadd.f32 0.0, %v562
        %564 = vdwg.mxu0
        %s565 = scalar_lea.vmem %s253, 32 [#allocation9]
        %566 = vst [vmem:[%s565] sm:$0xff] %v503
        %567 = vst [vmem:[%s565 + $0x8] sm:$0xff] %v523
        %568 = vst [vmem:[%s565 + $0x10] sm:$0xff] %v543
        %569 = vst [vmem:[%s565 + $0x18] sm:$0xff] %v563
        %s570 = smul.u32 8, 1
        %s571 = smul.u32 %s570, 8
        %s572 = sshll.u32 %s571, 4
        %573 = dma.done [#allocation3], %s572
        %s574 = sand.u32 %s136, 1
        %s575 = scalar_lea.sflag [#allocation6], %s574
        %s576 = sand.u32 %s136, 1
        %s577 = smul.addr %s576, 128
        %s578 = scalar_lea.vmem [#allocation9], %s577
        // Predicated region
        $region49: #{tpu_custom_call.1} parent=35 // pred_check
          %p579 = pneg %p146
        $region50: #{tpu_custom_call.1} parent=35 // pred_check_branch
          %581 = sbr.rel (%p579) target = $region52
        $region51: #{tpu_custom_call.1} parent=35 // pred_region
          %s582 = smul.u32 8, %s28
          %584 = vsyncadd %s575, 0
          %s585 = smul.addr %s27, 16
          %s586 = sadd.s32 %s582, %s585
          %s587 = smul.addr %s586, 8
          %s588 = scalar_lea.hbm %s5, %s587
          %s589 = sshll.u32 %s578, 4
          %s590 = int_to_ptr.vmem [resolvable:$true] %s589
          %s591 = sshll.u32 %s588, 4
          %s592 = int_to_ptr.hbm [resolvable:$true] %s591
          %597 = dma.vmem_to_hbm [thread:$0]  %s590, 2048, %s592, %s575, 1024, 1024, 64
        $region52: #{tpu_custom_call.1} parent=35 // pred_fallthru
          _
      $region36: #{tpu_custom_call.1} parent=5 // pred_fallthru
        _
      %p598 = scmp.le.s32.totalorder 2, %s18
      // Predicated region
      $region53: #{tpu_custom_call.1} parent=5 // pred_check
        %p599 = pneg %p598
      $region54: #{tpu_custom_call.1} parent=5 // pred_check_branch
        %601 = sbr.rel (%p599) target = $region56
      $region55: #{tpu_custom_call.1} parent=5 // pred_region
        %s602 = ssub.s32 %s18, 2
        // Predicated region
        $region57: #{tpu_custom_call.1} parent=55 // pred_check
          %p603 = pneg %p152
        $region58: #{tpu_custom_call.1} parent=55 // pred_check_branch
          %605 = sbr.rel (%p603) target = $region60
        $region59: #{tpu_custom_call.1} parent=55 // pred_region
          %s606 = sand.u32 %s137, 1
          %s607 = scalar_lea.sflag [#allocation6], %s606
          %s608 = sand.u32 %s137, 1
          %s609 = smul.addr %s608, 128
          %s610 = scalar_lea.vmem [#allocation9], %s609
          %612 = dma.done %s607, 2048
        $region60: #{tpu_custom_call.1} parent=55 // pred_fallthru
          _
      $region56: #{tpu_custom_call.1} parent=5 // pred_fallthru
        _
    $region6: #{tpu_custom_call.1} parent=1 // loop_footer
      %s22 = sadd.s32 1, %s18
    $region7: #{tpu_custom_call.1} parent=1 // loop_footer_branch
      %17 = sbr.rel target = $region3
    $region8: #{tpu_custom_call.1} parent=1 // loop_exit
      _
    %613 = vsyncpa [#allocation5], 1
    %s614 = scalar_lea.sflag [#allocation5], 1
    %615 = vsyncpa %s614, 1
    %616 = vsyncpa [#allocation8], 1
    %617 = vsyncpa [#allocation6], 1
    %s618 = scalar_lea.sflag [#allocation6], 1
    %619 = vsyncpa %s618, 1
  %620 = vsyncmov [#allocation3]
  %s621 = vpop.sfrf %620
  %p622 = scmp.eq.s32.totalorder %s621, 0
  %p623 = pneg %p622
  %625 = shalt.err (%p623)

</llo_original>
